<compile_context>
chip_gen: v5e
topology: v5e:2x2
jax: 0.10.0
libtpu: 0.0.40
codegen_flags: <defaults>
</compile_context>

<pallas_src>
import jax
import jax.numpy as jnp
from jax.experimental import pallas as pl
from jax.experimental.pallas import tpu as pltpu


def _round_up(x, m):
    return (x + m - 1) // m * m


# ----------------------------------------------------------------------------
# Pallas kernel: one (tm, tv) logits tile = (tm, E) x-tile @ (E, tv) W-tile
# ----------------------------------------------------------------------------
def gpt_head_kernel(x_ref, w_ref, o_ref):
    # x_ref: (tm, E)  bf16 activation row-tile
    # w_ref: (E, tv)  bf16 vocab tile of the pre-transposed output-head weight
    # o_ref: (tm, tv) logits tile (f32 or bf16)
    # Natural (M, K) x (K, N) feed to the MXU, f32 accumulation.
    o_ref[...] = jnp.dot(
        x_ref[...], w_ref[...], preferred_element_type=jnp.float32
    ).astype(o_ref.dtype)


# ----------------------------------------------------------------------------
# One-time weight preparation (hoisted out of the per-step forward)
# ----------------------------------------------------------------------------
def prepare_head_weight(w_out, pad_to=256):
    """Cast the nn.Linear-layout (V, E) weight to bf16, transpose to the
    MXU-natural (E, V) (K, N) layout, and zero-pad V to a multiple of
    `pad_to` (a multiple of 128). Call once; reuse across forward calls."""
    V, E = w_out.shape
    Vp = _round_up(V, pad_to)
    w_t = w_out.T.astype(jnp.bfloat16)          # (E, V)
    if Vp != V:
        w_t = jnp.pad(w_t, ((0, 0), (0, Vp - V)))
    return w_t, V


# ----------------------------------------------------------------------------
# Wrapper: embedding gather + pos add in XLA, tiled head matmul in Pallas
# ----------------------------------------------------------------------------
def dummy_gpt_forward(in_idx, tok_emb, pos_emb, w_head, vocab_size=None, *,
                      tm=512, tv=1024, out_dtype=jnp.float32,
                      vmem_budget_bytes=40 * 1024 * 1024):
    """DummyGPTModel forward.

    in_idx:     (B, S) int32 token ids
    tok_emb:    (V, E) float32 token embedding table
    pos_emb:    (C, E) float32 positional embedding table (C >= S)
    w_head:     preferred: (E, Vp) bf16 from prepare_head_weight() with
                vocab_size=V passed; fallback: raw (V, E) float32 nn.Linear
                weight with vocab_size=None (pays a per-call cast/transpose).
    returns:    (B, S, V) logits in out_dtype
    """
    B, S = in_idx.shape
    E = tok_emb.shape[1]
    BS = B * S

    # Data-dependent gather + broadcast add stay in XLA (fused, no tile()).
    # drop_emb / trf_blocks / final_norm (DummyLayerNorm) are identities.
    # TODO(synk): nn.Dropout in train mode would need RNG masking; eval semantics used here.
    tok = jnp.take(tok_emb, in_idx.reshape(-1), axis=0).reshape(B, S, E)
    x = (tok + pos_emb[:S][None, :, :]).reshape(BS, E)            # (BS, E) f32
    x_bf = x.astype(jnp.bfloat16)

    # Weight: use pre-prepared (E, Vp) bf16 if given, else prepare per call.
    if vocab_size is None:
        w_e_vp, V = prepare_head_weight(w_head, pad_to=256)
    else:
        V = vocab_size
        w_e_vp = w_head
    Vp = w_e_vp.shape[1]
    assert Vp % 128 == 0 and Vp >= V

    # Vocab tile: multiple of 128 (prefer 256), must divide padded vocab.
    tv = max(128, min(_round_up(tv, 128), Vp))
    while Vp % tv != 0:
        tv -= 128

    # Row tile: multiple of 128 when B*S allows it (MXU M occupancy),
    # otherwise the bf16 sublane-pack floor of 16.
    if BS >= 128:
        tm = max(128, min(_round_up(tm, 128), _round_up(BS, 128)))
    else:
        tm = _round_up(max(BS, 16), 16)

    # Keep the double-buffered footprint under the VMEM budget
    # (v7x: 64 MiB physical; v5e/v6e: 128 MiB).
    out_bytes = jnp.dtype(out_dtype).itemsize

    def _footprint(tm_, tv_):
        return 2 * (tm_ * E + E * tv_) * 2 + 2 * tm_ * tv_ * out_bytes

    while _footprint(tm, tv) > vmem_budget_bytes and tv > 128:
        tv //= 2                                   # halving preserves Vp % tv == 0
    while _footprint(tm, tv) > vmem_budget_bytes and tm > 128:
        tm //= 2

    BSp = _round_up(BS, tm)
    if BSp != BS:
        x_bf = jnp.pad(x_bf, ((0, BSp - BS), (0, 0)))

    logits = pl.pallas_call(
        gpt_head_kernel,
        out_shape=jax.ShapeDtypeStruct((BSp, Vp), out_dtype),
        # Vocab-major grid: rows innermost, so the weight tile (index depends
        # only on j) stays VMEM-resident across the row sweep -> W read once.
        # On v7x the leading "parallel" vocab axis is what gets core-sharded,
        # so each TensorCore streams a disjoint half of W.
        grid=(Vp // tv, BSp // tm),
        in_specs=[
            pl.BlockSpec((tm, E), lambda j, i: (i, 0)),   # activation row-tile
            pl.BlockSpec((E, tv), lambda j, i: (0, j)),   # weight vocab-tile (resident over i)
        ],
        out_specs=pl.BlockSpec((tm, tv), lambda j, i: (i, j)),
        compiler_params=pltpu.CompilerParams(
            dimension_semantics=("parallel", "parallel"),
            vmem_limit_bytes=min(max(_footprint(tm, tv) + (8 << 20), 32 << 20), 48 << 20),
        ),
    )(x_bf, w_e_vp)

    return logits[:BS, :V].reshape(B, S, V)


# ----------------------------------------------------------------------------
# Deterministic parameter init + small-shape driver
# ----------------------------------------------------------------------------
if __name__ == "__main__":
    # Small config consistent with the GPT forward (scaled down from 124M cfg).
    cfg = dict(vocab_size=1024, context_length=64, emb_dim=128)
    B, S = 4, 64

    key = jax.random.PRNGKey(0)
    k_tok, k_pos, k_out, k_idx = jax.random.split(key, 4)

    tok_emb = jax.random.normal(k_tok, (cfg["vocab_size"], cfg["emb_dim"]), jnp.float32) * 0.02
    pos_emb = jax.random.normal(k_pos, (cfg["context_length"], cfg["emb_dim"]), jnp.float32) * 0.02
    w_out = jax.random.normal(k_out, (cfg["vocab_size"], cfg["emb_dim"]), jnp.float32) * 0.02

    in_idx = jax.random.randint(k_idx, (B, S), 0, cfg["vocab_size"], jnp.int32)

    # One-time weight prep (cast + transpose + pad), hoisted out of the forward.
    w_head, V = prepare_head_weight(w_out)

    # Small tiles so the test exercises a real (vocab x rows) grid: (4, 2).
    logits = dummy_gpt_forward(in_idx, tok_emb, pos_emb, w_head, V, tm=128, tv=256)
    logits = jax.block_until_ready(logits)
    assert logits.shape == (B, S, V)

    # Reference 1: same math, same bf16 streaming, plain JAX (tight tolerance).
    tok_ref = jnp.take(tok_emb, in_idx.reshape(-1), axis=0).reshape(B, S, -1)
    x_ref = tok_ref + pos_emb[:S][None, :, :]
    ref_bf = jnp.dot(
        x_ref.reshape(B * S, -1).astype(jnp.bfloat16),
        w_out.T.astype(jnp.bfloat16),
        preferred_element_type=jnp.float32,
    ).reshape(B, S, V)
    assert jnp.allclose(logits, ref_bf, atol=1e-4, rtol=1e-4)

    # Reference 2: full-precision f32 reference (loose tolerance, bf16 rounding).
    ref_f32 = jnp.einsum("bse,ve->bsv", x_ref, w_out)
    assert jnp.allclose(logits, ref_f32, atol=2e-3, rtol=2e-2)

    # Fallback path: raw nn.Linear weight (per-call prep), default large tiles.
    logits2 = dummy_gpt_forward(in_idx, tok_emb, pos_emb, w_out)
    assert jnp.allclose(jax.block_until_ready(logits2), ref_bf, atol=1e-4, rtol=1e-4)

    # bf16-logits variant (halves the dominant (BS, V) HBM write for large outputs).
    logits_bf = dummy_gpt_forward(in_idx, tok_emb, pos_emb, w_head, V,
                                  out_dtype=jnp.bfloat16)
    logits_bf = jax.block_until_ready(logits_bf)
    assert logits_bf.dtype == jnp.bfloat16
    assert jnp.allclose(logits_bf.astype(jnp.float32), ref_f32, atol=3e-3, rtol=5e-2)

    print("KERNEL_OK")
</pallas_src>

<mosaic_0001>
module attributes {stable_mosaic.version = 11 : i64} {
  func.func @gpt_head_kernel(%arg0: i32, %arg1: i32, %arg2: memref<128x128xbf16, #tpu.memory_space<vmem>>, %arg3: memref<128x256xbf16, #tpu.memory_space<vmem>>, %arg4: memref<128x256xf32, #tpu.memory_space<vmem>>) attributes {dimension_semantics = [#tpu.dimension_semantics<parallel>, #tpu.dimension_semantics<parallel>], iteration_bounds = array<i64: 4, 2>, scalar_prefetch = 0 : i64, scratch_operands = 0 : i64, tpu.core_type = #tpu.core_type<tc>, window_params = [{transform_indices = @transform_0, window_bounds = array<i64: 128, 128>}, {transform_indices = @transform_1, window_bounds = array<i64: 128, 256>}, {transform_indices = @transform_2, window_bounds = array<i64: 128, 256>}]} {
    %c0 = arith.constant 0 : index
    %c0_0 = arith.constant 0 : index
    %0 = vector.load %arg2[%c0, %c0_0] : memref<128x128xbf16, #tpu.memory_space<vmem>>, vector<128x128xbf16>
    %c0_1 = arith.constant 0 : index
    %c0_2 = arith.constant 0 : index
    %1 = vector.load %arg3[%c0_1, %c0_2] : memref<128x256xbf16, #tpu.memory_space<vmem>>, vector<128x256xbf16>
    %cst = arith.constant dense<0.000000e+00> : vector<128x256xf32>
    %2 = tpu.matmul %0, %1, %cst {dimension_numbers = #tpu.dot_dimension_numbers<[1], [0], [0], [1], [0, 0, 1, 1], [], []>} : vector<128x128xbf16>, vector<128x256xbf16>, vector<128x256xf32> -> vector<128x256xf32>
    %c0_3 = arith.constant 0 : index
    %c0_4 = arith.constant 0 : index
    %3 = vector.load %arg4[%c0_3, %c0_4] : memref<128x256xf32, #tpu.memory_space<vmem>>, vector<128x256xf32>
    tpu.vector_store %arg4[%c0_3, %c0_4], %2 {strides = array<i32>} : memref<128x256xf32, #tpu.memory_space<vmem>>, vector<128x256xf32>,
    return
  }
  func.func @transform_0(%arg0: i32, %arg1: i32) -> (i32, i32) {
    %c0_i32 = arith.constant 0 : i32
    %c0_i32_0 = arith.constant 0 : i32
    return %arg1, %c0_i32 : i32, i32
  }
  func.func @transform_1(%arg0: i32, %arg1: i32) -> (i32, i32) {
    %c0_i32 = arith.constant 0 : i32
    %c0_i32_0 = arith.constant 0 : i32
    return %c0_i32, %arg0 : i32, i32
  }
  func.func @transform_2(%arg0: i32, %arg1: i32) -> (i32, i32) {
    %c0_i32 = arith.constant 0 : i32
    return %arg1, %arg0 : i32, i32
  }
}

</mosaic_0001>

<llo_original>
// kernel: tpu_custom_call.1
$region0: #{tpu_custom_call.1}
  #allocation0 [shape = 'u32[]', space=smem, size = 0x4, offset = 0x4, fixed_abs, tag = 'smem constant byte address 0x4 - core index']
  #allocation1 [shape = 'u32[72,128]{1,0:T(1,128)}', space=vmem, size = 0x9000, scoped, tag = 'internal scratch']
  %s0 = inlined_call_operand.hbm [shape: bf16[256,128], index: 0, kind: input, shape index: {}]
  %s1 = inlined_call_operand.hbm [shape: bf16[128,1024], index: 1, kind: input, shape index: {}]
  %s2 = inlined_call_operand.hbm [shape: f32[256,1024], index: 2, kind: output, shape index: {}]
  %s3 = sld [smem:[#allocation0]]
  $region49: #{tpu_custom_call.1} parent=0
    _
  %s5 = ssub.s32 1, %s3
  %s6 = scalar_select 0, %s5, %s3
  $region1: #{tpu_custom_call.1} parent=0
    #allocation2 [shape = 'u8[65536]{0}', space=vmem, size = 0x10000, scoped, tag = 'input window, operand 0']
    #allocation3 [shape = 's32[2]{0}', space=sflag, size = 0x8, scoped, tag = 'scoped memory for tpu_custom_call.1']
    #allocation4 [shape = 's32[2]{0}', space=sflag, size = 0x8, scoped, tag = 'scoped memory for tpu_custom_call.1']
    #allocation5 [shape = 'u8[131072]{0}', space=vmem, size = 0x20000, scoped, tag = 'input window, operand 1']
    #allocation6 [shape = 's32[2]{0}', space=sflag, size = 0x8, scoped, tag = 'scoped memory for tpu_custom_call.1']
    #allocation7 [shape = 'u8[262144]{0}', space=vmem, size = 0x40000, scoped, tag = 'output window, operand 0']
    %7 = vsyncpa [#allocation3], 0
    %s8 = scalar_lea.sflag [#allocation3], 1
    %9 = vsyncpa %s8, 0
    %10 = vsyncpa [#allocation6], 0
    %s11 = scalar_lea.sflag [#allocation6], 1
    %12 = vsyncpa %s11, 0
    %13 = vsyncpa [#allocation4], 0
    %s14 = scalar_lea.sflag [#allocation4], 1
    %15 = vsyncpa %s14, 0
    loop: start=0, step=1, limit=10
    $region2: #{tpu_custom_call.1} parent=1 // loop_pre_header
      _
    $region3: #{tpu_custom_call.1} parent=1 // loop_header
      %s17 = sphi 0, %s21
      %p18 = scmp.ge.s32.totalorder %s17, 10
      %s24 = sphi 0, %s36
      %s25 = sphi 0, %s32
      %s26 = sphi 0, %s24
      %s27 = sphi 0, %s25
      %s28 = sphi 0, %s26
      %s29 = sphi 0, %s27
      %s39 = sphi 0, %s41
      %s42 = sphi 0, %s39
      %s43 = sphi 0, %s42
      %s59 = sphi 0, %s43
      %s65 = sphi 0, %s67
      %s68 = sphi 0, %s65
      %s69 = sphi 0, %s68
      %s85 = sphi 0, %s69
      %s93 = sphi 0, %s95
      %s96 = sphi 0, %s93
      %s97 = sphi 0, %s96
      %s113 = sphi 0, %s97
    $region4: #{tpu_custom_call.1} parent=1 // loop_header_branch
      %20 = sbr.rel (%p18) target = $region8
    $region5: #{tpu_custom_call.1} parent=1 // loop_body
      %s22 = ssub.s32 %s17, 1
      %s23 = ssub.s32 %s17, 2
      %s30 = sadd.s32 1, %s25
      %p31 = scmp.ge.s32.totalorder %s30, 2
      %s32 = scalar_select %p31, 0, %s30
      %s33 = sadd.s32 1, %s24
      %s34 = scalar_select %p31, %s33, %s24
      %p35 = scmp.ge.s32.totalorder %s34, 4
      %s36 = scalar_select %p35, 0, %s34
      %s37 = ssub.s32 %s25, %s32
      %p38 = scmp.eq.s32.totalorder %s37, 0
      %s40 = sadd.s32 %s39, 1
      %s41 = scalar_select %p38, %s39, %s40
      %p44 = pneg %p38
      %p45 = scmp.eq.s32.totalorder %s17, 7
      %p46 = por %p44, %p45
      %p47 = scmp.ne.s32.totalorder %s39, %s42
      %p48 = scmp.eq.s32.totalorder %s17, 0
      %p49 = por %p47, %p48
      %p50 = scmp.ne.s32.totalorder %s39, %s42
      %p51 = scmp.eq.s32.totalorder %s22, 7
      %p52 = por %p50, %p51
      %p53 = scmp.ne.s32.totalorder %s42, %s43
      %p54 = scmp.eq.s32.totalorder %s22, 0
      %p55 = por %p53, %p54
      %p56 = scmp.ne.s32.totalorder %s42, %s43
      %p57 = scmp.eq.s32.totalorder %s23, 7
      %p58 = por %p56, %p57
      %p60 = scmp.ne.s32.totalorder %s43, %s59
      %p61 = scmp.eq.s32.totalorder %s23, 0
      %p62 = por %p60, %p61
      %s63 = ssub.s32 %s24, %s36
      %p64 = scmp.eq.s32.totalorder %s63, 0
      %s66 = sadd.s32 %s65, 1
      %s67 = scalar_select %p64, %s65, %s66
      %p70 = pneg %p64
      %p71 = scmp.eq.s32.totalorder %s17, 7
      %p72 = por %p70, %p71
      %p73 = scmp.ne.s32.totalorder %s65, %s68
      %p74 = scmp.eq.s32.totalorder %s17, 0
      %p75 = por %p73, %p74
      %p76 = scmp.ne.s32.totalorder %s65, %s68
      %p77 = scmp.eq.s32.totalorder %s22, 7
      %p78 = por %p76, %p77
      %p79 = scmp.ne.s32.totalorder %s68, %s69
      %p80 = scmp.eq.s32.totalorder %s22, 0
      %p81 = por %p79, %p80
      %p82 = scmp.ne.s32.totalorder %s68, %s69
      %p83 = scmp.eq.s32.totalorder %s23, 7
      %p84 = por %p82, %p83
      %p86 = scmp.ne.s32.totalorder %s69, %s85
      %p87 = scmp.eq.s32.totalorder %s23, 0
      %p88 = por %p86, %p87
      %s89 = ssub.s32 %s25, %s32
      %s90 = ssub.s32 %s24, %s36
      %s91 = sor.u32 %s89, %s90
      %p92 = scmp.eq.s32.totalorder %s91, 0
      %s94 = sadd.s32 %s93, 1
      %s95 = scalar_select %p92, %s93, %s94
      %p98 = pneg %p92
      %p99 = scmp.eq.s32.totalorder %s17, 7
      %p100 = por %p98, %p99
      %p101 = scmp.ne.s32.totalorder %s93, %s96
      %p102 = scmp.eq.s32.totalorder %s17, 0
      %p103 = por %p101, %p102
      %p104 = scmp.ne.s32.totalorder %s93, %s96
      %p105 = scmp.eq.s32.totalorder %s22, 7
      %p106 = por %p104, %p105
      %p107 = scmp.ne.s32.totalorder %s96, %s97
      %p108 = scmp.eq.s32.totalorder %s22, 0
      %p109 = por %p107, %p108
      %p110 = scmp.ne.s32.totalorder %s96, %s97
      %p111 = scmp.eq.s32.totalorder %s23, 7
      %p112 = por %p110, %p111
      %p114 = scmp.ne.s32.totalorder %s97, %s113
      %p115 = scmp.eq.s32.totalorder %s23, 0
      %p116 = por %p114, %p115
      %p117 = scmp.le.s32.totalorder 1, %s17
      %p118 = scmp.lt.s32.totalorder %s17, 9
      %p119 = pnand %p117, %p118
      %p120 = pneg %p119
      // Predicated region
      $region9: #{tpu_custom_call.1} parent=5 // pred_check
        _
      $region10: #{tpu_custom_call.1} parent=5 // pred_check_branch
        %122 = sbr.rel (%p119) target = $region12
      $region11: #{tpu_custom_call.1} parent=5 // pred_region
        %s123 = ssub.s32 %s17, 1
      $region12: #{tpu_custom_call.1} parent=5 // pred_fallthru
        _
      %p124 = scmp.lt.s32.totalorder %s17, 8
      // Predicated region
      $region13: #{tpu_custom_call.1} parent=5 // pred_check
        %p125 = pneg %p124
      $region14: #{tpu_custom_call.1} parent=5 // pred_check_branch
        %127 = sbr.rel (%p125) target = $region16
      $region15: #{tpu_custom_call.1} parent=5 // pred_region
        // Predicated region
        $region17: #{tpu_custom_call.1} parent=15 // pred_check
          %p128 = pneg %p49
        $region18: #{tpu_custom_call.1} parent=15 // pred_check_branch
          %130 = sbr.rel (%p128) target = $region20
        $region19: #{tpu_custom_call.1} parent=15 // pred_region
          %s131 = sand.u32 %s39, 1
          %s132 = scalar_lea.sflag [#allocation3], %s131
          %s133 = sand.u32 %s39, 1
          %s134 = smul.addr %s133, 64
          %s135 = scalar_lea.vmem [#allocation2], %s134
          %s136 = smul.u32 16, %s25
          %138 = vsyncadd %s132, 0
          %s139 = smul.addr %s136, 4
          %s140 = scalar_lea.hbm %s0, %s139
          %s141 = sshll.u32 %s140, 4
          %s142 = int_to_ptr.hbm [resolvable:$true] %s141
          %s143 = sshll.u32 %s135, 4
          %s144 = int_to_ptr.vmem [resolvable:$true] %s143
          %149 = dma.hbm_to_vmem [thread:$0]  %s142, 1024, %s144, %s132, 64, 64, 4
        $region20: #{tpu_custom_call.1} parent=15 // pred_fallthru
          _
        // Predicated region
        $region21: #{tpu_custom_call.1} parent=15 // pred_check
          %p150 = pneg %p75
        $region22: #{tpu_custom_call.1} parent=15 // pred_check_branch
          %152 = sbr.rel (%p150) target = $region24
        $region23: #{tpu_custom_call.1} parent=15 // pred_region
          %s153 = sand.u32 %s65, 1
          %s154 = scalar_lea.sflag [#allocation6], %s153
          %s155 = sand.u32 %s65, 1
          %s156 = smul.addr %s155, 128
          %s157 = scalar_lea.vmem [#allocation5], %s156
          %s158 = smul.u32 2, %s24
          %160 = vsyncadd %s154, 0
          %s161 = smul.addr %s158, 4
          %s162 = scalar_lea.hbm %s1, %s161
          %s163 = sshll.u32 %s162, 4
          %s164 = int_to_ptr.hbm [resolvable:$true] %s163
          %s165 = sshll.u32 %s157, 4
          %s166 = int_to_ptr.vmem [resolvable:$true] %s165
          %171 = dma.hbm_to_vmem [thread:$0]  %s164, 2048, %s166, %s154, 512, 128, 8
        $region24: #{tpu_custom_call.1} parent=15 // pred_fallthru
          _
      $region16: #{tpu_custom_call.1} parent=5 // pred_fallthru
        _
      %p172 = scmp.le.s32.totalorder 1, %s17
      %p173 = scmp.lt.s32.totalorder %s17, 9
      %p174 = pnand %p172, %p173
      %p175 = pneg %p174
      // Predicated region
      $region25: #{tpu_custom_call.1} parent=5 // pred_check
        _
      $region26: #{tpu_custom_call.1} parent=5 // pred_check_branch
        %177 = sbr.rel (%p174) target = $region28
      $region27: #{tpu_custom_call.1} parent=5 // pred_region
        %s178 = ssub.s32 %s17, 1
        %s179 = sand.u32 %s42, 1
        %s180 = scalar_lea.sflag [#allocation3], %s179
        %s181 = sand.u32 %s42, 1
        %s182 = smul.addr %s181, 64
        %s183 = scalar_lea.vmem [#allocation2], %s182
        // Predicated region
        $region29: #{tpu_custom_call.1} parent=27 // pred_check
          %p184 = pneg %p55
        $region30: #{tpu_custom_call.1} parent=27 // pred_check_branch
          %186 = sbr.rel (%p184) target = $region32
        $region31: #{tpu_custom_call.1} parent=27 // pred_region
          %188 = dma.done %s180, 1024
        $region32: #{tpu_custom_call.1} parent=27 // pred_fallthru
          _
        %s189 = sand.u32 %s68, 1
        %s190 = scalar_lea.sflag [#allocation6], %s189
        %s191 = sand.u32 %s68, 1
        %s192 = smul.addr %s191, 128
        %s193 = scalar_lea.vmem [#allocation5], %s192
        // Predicated region
        $region33: #{tpu_custom_call.1} parent=27 // pred_check
          %p194 = pneg %p81
        $region34: #{tpu_custom_call.1} parent=27 // pred_check_branch
          %196 = sbr.rel (%p194) target = $region36
        $region35: #{tpu_custom_call.1} parent=27 // pred_region
          %198 = dma.done %s190, 2048
        $region36: #{tpu_custom_call.1} parent=27 // pred_fallthru
          _
        %s199 = sand.u32 %s42, 1
        %s200 = scalar_lea.sflag [#allocation3], %s199
        %s201 = sand.u32 %s42, 1
        %s202 = smul.addr %s201, 64
        %s203 = scalar_lea.vmem [#allocation2], %s202
        %p204 = pneg %p55
        %p205 = pneg %p52
        %s206 = sand.u32 %s68, 1
        %s207 = scalar_lea.sflag [#allocation6], %s206
        %s208 = sand.u32 %s68, 1
        %s209 = smul.addr %s208, 128
        %s210 = scalar_lea.vmem [#allocation5], %s209
        %p211 = pneg %p81
        %p212 = pneg %p78
        %p213 = pneg %p109
        %p214 = pneg %p106
        %s215 = sand.u32 %s96, 1
        %s216 = scalar_lea.sflag [#allocation4], %s215
        %s217 = sand.u32 %s96, 1
        %s218 = smul.addr %s217, 256
        %s219 = scalar_lea.vmem [#allocation7], %s218
        %s220 = smul.u32 16, %s27
        %s221 = smul.u32 2, %s26
        %s222 = smul.u32 16, %s27
        %s223 = smul.u32 2, %s26
        %v224 = vld [vmem:[%s183] sm:$0xf]
        %v225 = vld [vmem:[%s183 + $0x4] sm:$0xf]
        %v226 = vld [vmem:[%s183 + $0x8] sm:$0xf]
        %v227 = vld [vmem:[%s183 + $0xc] sm:$0xf]
        %v228 = vld [vmem:[%s183 + $0x10] sm:$0xf]
        %v229 = vld [vmem:[%s183 + $0x14] sm:$0xf]
        %v230 = vld [vmem:[%s183 + $0x18] sm:$0xf]
        %v231 = vld [vmem:[%s183 + $0x1c] sm:$0xf]
        %v232 = vld [vmem:[%s183 + $0x20] sm:$0xf]
        %v233 = vld [vmem:[%s183 + $0x24] sm:$0xf]
        %v234 = vld [vmem:[%s183 + $0x28] sm:$0xf]
        %v235 = vld [vmem:[%s183 + $0x2c] sm:$0xf]
        %v236 = vld [vmem:[%s183 + $0x30] sm:$0xf]
        %v237 = vld [vmem:[%s183 + $0x34] sm:$0xf]
        %v238 = vld [vmem:[%s183 + $0x38] sm:$0xf]
        %v239 = vld [vmem:[%s183 + $0x3c] sm:$0xf]
        %v240 = vld [vmem:[%s193] sm:$0xff]
        %v241 = vld [vmem:[%s193 + $0x8] sm:$0xff]
        %v242 = vld [vmem:[%s193 + $0x10] sm:$0xff]
        %v243 = vld [vmem:[%s193 + $0x18] sm:$0xff]
        %v244 = vld [vmem:[%s193 + $0x20] sm:$0xff]
        %v245 = vld [vmem:[%s193 + $0x28] sm:$0xff]
        %v246 = vld [vmem:[%s193 + $0x30] sm:$0xff]
        %v247 = vld [vmem:[%s193 + $0x38] sm:$0xff]
        %v248 = vld [vmem:[%s193 + $0x40] sm:$0xff]
        %v249 = vld [vmem:[%s193 + $0x48] sm:$0xff]
        %v250 = vld [vmem:[%s193 + $0x50] sm:$0xff]
        %v251 = vld [vmem:[%s193 + $0x58] sm:$0xff]
        %v252 = vld [vmem:[%s193 + $0x60] sm:$0xff]
        %v253 = vld [vmem:[%s193 + $0x68] sm:$0xff]
        %v254 = vld [vmem:[%s193 + $0x70] sm:$0xff]
        %v255 = vld [vmem:[%s193 + $0x78] sm:$0xff]
        %v272 = vunpack.c.l.b16 %v224
        %v273 = vunpack.c.l.b16 %v225
        %v274 = vunpack.c.l.b16 %v226
        %v275 = vunpack.c.l.b16 %v227
        %v276 = vunpack.c.l.b16 %v228
        %v277 = vunpack.c.l.b16 %v229
        %v278 = vunpack.c.l.b16 %v230
        %v279 = vunpack.c.l.b16 %v231
        %v280 = vunpack.c.l.b16 %v232
        %v281 = vunpack.c.l.b16 %v233
        %v282 = vunpack.c.l.b16 %v234
        %v283 = vunpack.c.l.b16 %v235
        %v284 = vunpack.c.l.b16 %v236
        %v285 = vunpack.c.l.b16 %v237
        %v286 = vunpack.c.l.b16 %v238
        %v287 = vunpack.c.l.b16 %v239
        %v288 = vpack.c.b16 %v273, %v272
        %v289 = vpack.c.b16 %v275, %v274
        %v290 = vpack.c.b16 %v277, %v276
        %v291 = vpack.c.b16 %v279, %v278
        %v292 = vpack.c.b16 %v281, %v280
        %v293 = vpack.c.b16 %v283, %v282
        %v294 = vpack.c.b16 %v285, %v284
        %v295 = vpack.c.b16 %v287, %v286
        %v320 = vunpack.c.l.b16 %v240
        %v321 = vunpack.c.h.b16 %v240
        %v322 = vunpack.c.l.b16 %v241
        %v323 = vunpack.c.h.b16 %v241
        %v324 = vunpack.c.l.b16 %v242
        %v325 = vunpack.c.h.b16 %v242
        %v326 = vunpack.c.l.b16 %v243
        %v327 = vunpack.c.h.b16 %v243
        %v328 = vunpack.c.l.b16 %v244
        %v329 = vunpack.c.h.b16 %v244
        %v330 = vunpack.c.l.b16 %v245
        %v331 = vunpack.c.h.b16 %v245
        %v332 = vunpack.c.l.b16 %v246
        %v333 = vunpack.c.h.b16 %v246
        %v334 = vunpack.c.l.b16 %v247
        %v335 = vunpack.c.h.b16 %v247
        %v336 = vunpack.c.l.b16 %v248
        %v337 = vunpack.c.h.b16 %v248
        %v338 = vunpack.c.l.b16 %v249
        %v339 = vunpack.c.h.b16 %v249
        %v340 = vunpack.c.l.b16 %v250
        %v341 = vunpack.c.h.b16 %v250
        %v342 = vunpack.c.l.b16 %v251
        %v343 = vunpack.c.h.b16 %v251
        %v344 = vunpack.c.l.b16 %v252
        %v345 = vunpack.c.h.b16 %v252
        %v346 = vunpack.c.l.b16 %v253
        %v347 = vunpack.c.h.b16 %v253
        %v348 = vunpack.c.l.b16 %v254
        %v349 = vunpack.c.h.b16 %v254
        %v350 = vunpack.c.l.b16 %v255
        %v351 = vunpack.c.h.b16 %v255
        %v352 = vpack.c.b16 %v322, %v320
        %v353 = vpack.c.b16 %v323, %v321
        %v354 = vpack.c.b16 %v326, %v324
        %v355 = vpack.c.b16 %v327, %v325
        %v356 = vpack.c.b16 %v330, %v328
        %v357 = vpack.c.b16 %v331, %v329
        %v358 = vpack.c.b16 %v334, %v332
        %v359 = vpack.c.b16 %v335, %v333
        %v360 = vpack.c.b16 %v338, %v336
        %v361 = vpack.c.b16 %v339, %v337
        %v362 = vpack.c.b16 %v342, %v340
        %v363 = vpack.c.b16 %v343, %v341
        %v364 = vpack.c.b16 %v346, %v344
        %v365 = vpack.c.b16 %v347, %v345
        %v366 = vpack.c.b16 %v350, %v348
        %v367 = vpack.c.b16 %v351, %v349
        %384 = vmatpush.bf16.msra.mxu0 %v366
        %385 = vmatpush.bf16.msra.mxu0 %v364
        %386 = vmatpush.bf16.msra.mxu0 %v362
        %387 = vmatpush.bf16.msra.mxu0 %v360
        %388 = vmatpush.bf16.msra.mxu0 %v358
        %389 = vmatpush.bf16.msra.mxu0 %v356
        %390 = vmatpush.bf16.msra.mxu0 %v354
        %391 = vmatpush.bf16.msra.mxu0 %v352
        %392 = vmatmul.bf16.gmra.mxu0 %v288
        %v393 = vpop.f32.mrf.mxu0
        %v394 = vadd.f32 0.0, %v393
        %v395 = vpop.f32.mrf.mxu0
        %v396 = vadd.f32 0.0, %v395
        %397 = vmatmul.bf16.gmra.mxu0 %v289
        %v398 = vpop.f32.mrf.mxu0
        %v399 = vadd.f32 0.0, %v398
        %v400 = vpop.f32.mrf.mxu0
        %v401 = vadd.f32 0.0, %v400
        %402 = vmatmul.bf16.gmra.mxu0 %v290
        %v403 = vpop.f32.mrf.mxu0
        %v404 = vadd.f32 0.0, %v403
        %v405 = vpop.f32.mrf.mxu0
        %v406 = vadd.f32 0.0, %v405
        %407 = vmatmul.bf16.gmra.mxu0 %v291
        %v408 = vpop.f32.mrf.mxu0
        %v409 = vadd.f32 0.0, %v408
        %v410 = vpop.f32.mrf.mxu0
        %v411 = vadd.f32 0.0, %v410
        %412 = vmatmul.bf16.gmra.mxu0 %v292
        %v413 = vpop.f32.mrf.mxu0
        %v414 = vadd.f32 0.0, %v413
        %v415 = vpop.f32.mrf.mxu0
        %v416 = vadd.f32 0.0, %v415
        %417 = vmatmul.bf16.gmra.mxu0 %v293
        %v418 = vpop.f32.mrf.mxu0
        %v419 = vadd.f32 0.0, %v418
        %v420 = vpop.f32.mrf.mxu0
        %v421 = vadd.f32 0.0, %v420
        %422 = vmatmul.bf16.gmra.mxu0 %v294
        %v423 = vpop.f32.mrf.mxu0
        %v424 = vadd.f32 0.0, %v423
        %v425 = vpop.f32.mrf.mxu0
        %v426 = vadd.f32 0.0, %v425
        %427 = vmatmul.bf16.gmra.mxu0 %v295
        %v428 = vpop.f32.mrf.mxu0
        %v429 = vadd.f32 0.0, %v428
        %v430 = vpop.f32.mrf.mxu0
        %v431 = vadd.f32 0.0, %v430
        %432 = vdwg.mxu0
        %433 = vmatpush.bf16.msra.mxu0 %v367
        %434 = vmatpush.bf16.msra.mxu0 %v365
        %435 = vmatpush.bf16.msra.mxu0 %v363
        %436 = vmatpush.bf16.msra.mxu0 %v361
        %437 = vmatpush.bf16.msra.mxu0 %v359
        %438 = vmatpush.bf16.msra.mxu0 %v357
        %439 = vmatpush.bf16.msra.mxu0 %v355
        %440 = vmatpush.bf16.msra.mxu0 %v353
        %441 = vmatmul.bf16.gmra.mxu0 %v288
        %v442 = vpop.f32.mrf.mxu0
        %v443 = vadd.f32 0.0, %v442
        %v444 = vpop.f32.mrf.mxu0
        %v445 = vadd.f32 0.0, %v444
        %446 = vmatmul.bf16.gmra.mxu0 %v289
        %v447 = vpop.f32.mrf.mxu0
        %v448 = vadd.f32 0.0, %v447
        %v449 = vpop.f32.mrf.mxu0
        %v450 = vadd.f32 0.0, %v449
        %451 = vmatmul.bf16.gmra.mxu0 %v290
        %v452 = vpop.f32.mrf.mxu0
        %v453 = vadd.f32 0.0, %v452
        %v454 = vpop.f32.mrf.mxu0
        %v455 = vadd.f32 0.0, %v454
        %456 = vmatmul.bf16.gmra.mxu0 %v291
        %v457 = vpop.f32.mrf.mxu0
        %v458 = vadd.f32 0.0, %v457
        %v459 = vpop.f32.mrf.mxu0
        %v460 = vadd.f32 0.0, %v459
        %461 = vmatmul.bf16.gmra.mxu0 %v292
        %v462 = vpop.f32.mrf.mxu0
        %v463 = vadd.f32 0.0, %v462
        %v464 = vpop.f32.mrf.mxu0
        %v465 = vadd.f32 0.0, %v464
        %466 = vmatmul.bf16.gmra.mxu0 %v293
        %v467 = vpop.f32.mrf.mxu0
        %v468 = vadd.f32 0.0, %v467
        %v469 = vpop.f32.mrf.mxu0
        %v470 = vadd.f32 0.0, %v469
        %471 = vmatmul.bf16.gmra.mxu0 %v294
        %v472 = vpop.f32.mrf.mxu0
        %v473 = vadd.f32 0.0, %v472
        %v474 = vpop.f32.mrf.mxu0
        %v475 = vadd.f32 0.0, %v474
        %476 = vmatmul.bf16.gmra.mxu0 %v295
        %v477 = vpop.f32.mrf.mxu0
        %v478 = vadd.f32 0.0, %v477
        %v479 = vpop.f32.mrf.mxu0
        %v480 = vadd.f32 0.0, %v479
        %481 = vdwg.mxu0
        %482 = vst [vmem:[%s219] sm:$0xff] %v394
        %483 = vst [vmem:[%s219 + $0x8] sm:$0xff] %v443
        %484 = vst [vmem:[%s219 + $0x10] sm:$0xff] %v396
        %485 = vst [vmem:[%s219 + $0x18] sm:$0xff] %v445
        %486 = vst [vmem:[%s219 + $0x20] sm:$0xff] %v399
        %487 = vst [vmem:[%s219 + $0x28] sm:$0xff] %v448
        %488 = vst [vmem:[%s219 + $0x30] sm:$0xff] %v401
        %489 = vst [vmem:[%s219 + $0x38] sm:$0xff] %v450
        %490 = vst [vmem:[%s219 + $0x40] sm:$0xff] %v404
        %491 = vst [vmem:[%s219 + $0x48] sm:$0xff] %v453
        %492 = vst [vmem:[%s219 + $0x50] sm:$0xff] %v406
        %493 = vst [vmem:[%s219 + $0x58] sm:$0xff] %v455
        %494 = vst [vmem:[%s219 + $0x60] sm:$0xff] %v409
        %495 = vst [vmem:[%s219 + $0x68] sm:$0xff] %v458
        %496 = vst [vmem:[%s219 + $0x70] sm:$0xff] %v411
        %497 = vst [vmem:[%s219 + $0x78] sm:$0xff] %v460
        %498 = vst [vmem:[%s219 + $0x80] sm:$0xff] %v414
        %499 = vst [vmem:[%s219 + $0x88] sm:$0xff] %v463
        %500 = vst [vmem:[%s219 + $0x90] sm:$0xff] %v416
        %501 = vst [vmem:[%s219 + $0x98] sm:$0xff] %v465
        %502 = vst [vmem:[%s219 + $0xa0] sm:$0xff] %v419
        %503 = vst [vmem:[%s219 + $0xa8] sm:$0xff] %v468
        %504 = vst [vmem:[%s219 + $0xb0] sm:$0xff] %v421
        %505 = vst [vmem:[%s219 + $0xb8] sm:$0xff] %v470
        %506 = vst [vmem:[%s219 + $0xc0] sm:$0xff] %v424
        %507 = vst [vmem:[%s219 + $0xc8] sm:$0xff] %v473
        %508 = vst [vmem:[%s219 + $0xd0] sm:$0xff] %v426
        %509 = vst [vmem:[%s219 + $0xd8] sm:$0xff] %v475
        %510 = vst [vmem:[%s219 + $0xe0] sm:$0xff] %v429
        %511 = vst [vmem:[%s219 + $0xe8] sm:$0xff] %v478
        %512 = vst [vmem:[%s219 + $0xf0] sm:$0xff] %v431
        %513 = vst [vmem:[%s219 + $0xf8] sm:$0xff] %v480
        %s514 = sand.u32 %s96, 1
        %s515 = scalar_lea.sflag [#allocation4], %s514
        %s516 = sand.u32 %s96, 1
        %s517 = smul.addr %s516, 256
        %s518 = scalar_lea.vmem [#allocation7], %s517
        // Predicated region
        $region37: #{tpu_custom_call.1} parent=27 // pred_check
          %p519 = pneg %p106
        $region38: #{tpu_custom_call.1} parent=27 // pred_check_branch
          %521 = sbr.rel (%p519) target = $region40
        $region39: #{tpu_custom_call.1} parent=27 // pred_region
          %s522 = smul.u32 16, %s27
          %s523 = smul.u32 2, %s26
          %525 = vsyncadd %s515, 0
          %s526 = smul.addr %s522, 8
          %s527 = sadd.s32 %s523, %s526
          %s528 = smul.addr %s527, 8
          %s529 = scalar_lea.hbm %s2, %s528
          %s530 = sshll.u32 %s518, 4
          %s531 = int_to_ptr.vmem [resolvable:$true] %s530
          %s532 = sshll.u32 %s529, 4
          %s533 = int_to_ptr.hbm [resolvable:$true] %s532
          %538 = dma.vmem_to_hbm [thread:$0]  %s531, 4096, %s533, %s515, 256, 1024, 16
        $region40: #{tpu_custom_call.1} parent=27 // pred_fallthru
          _
      $region28: #{tpu_custom_call.1} parent=5 // pred_fallthru
        _
      %p539 = scmp.le.s32.totalorder 2, %s17
      // Predicated region
      $region41: #{tpu_custom_call.1} parent=5 // pred_check
        %p540 = pneg %p539
      $region42: #{tpu_custom_call.1} parent=5 // pred_check_branch
        %542 = sbr.rel (%p540) target = $region44
      $region43: #{tpu_custom_call.1} parent=5 // pred_region
        %s543 = ssub.s32 %s17, 2
        // Predicated region
        $region45: #{tpu_custom_call.1} parent=43 // pred_check
          %p544 = pneg %p112
        $region46: #{tpu_custom_call.1} parent=43 // pred_check_branch
          %546 = sbr.rel (%p544) target = $region48
        $region47: #{tpu_custom_call.1} parent=43 // pred_region
          %s547 = sand.u32 %s97, 1
          %s548 = scalar_lea.sflag [#allocation4], %s547
          %s549 = sand.u32 %s97, 1
          %s550 = smul.addr %s549, 256
          %s551 = scalar_lea.vmem [#allocation7], %s550
          %553 = dma.done %s548, 4096
        $region48: #{tpu_custom_call.1} parent=43 // pred_fallthru
          _
      $region44: #{tpu_custom_call.1} parent=5 // pred_fallthru
        _
    $region6: #{tpu_custom_call.1} parent=1 // loop_footer
      %s21 = sadd.s32 1, %s17
    $region7: #{tpu_custom_call.1} parent=1 // loop_footer_branch
      %16 = sbr.rel target = $region3
    $region8: #{tpu_custom_call.1} parent=1 // loop_exit
      _
    %554 = vsyncpa [#allocation3], 1
    %s555 = scalar_lea.sflag [#allocation3], 1
    %556 = vsyncpa %s555, 1
    %557 = vsyncpa [#allocation6], 1
    %s558 = scalar_lea.sflag [#allocation6], 1
    %559 = vsyncpa %s558, 1
    %560 = vsyncpa [#allocation4], 1
    %s561 = scalar_lea.sflag [#allocation4], 1
    %562 = vsyncpa %s561, 1

</llo_original>
